<compile_context>
chip_gen: v7x
topology: tpu7x:2x2x1
jax: 0.10.0
libtpu: 0.0.40
codegen_flags: <defaults>
</compile_context>

<pallas_src>
import numpy as np
import jax
import jax.numpy as jnp
from jax import lax
from jax.experimental import pallas as pl
from jax.experimental.pallas import tpu as pltpu

NUM_KP = 21
FEAT_HALF = 3 * NUM_KP            # 63
HID = 128                         # hidden width of the stitching MLP
OUT = 3 * NUM_KP + 2              # 65

# Packed bf16 parameter slab (every block 8-sublane aligned):
W1_ROW = 0                        # rows [0,256): stacked W1
                                  #   rows   0.. 62 : W1[:63]   (rows  63..127 zero)
                                  #   rows 128..190 : W1[63:126](rows 191..255 zero)
W2_ROW = 2 * HID                  # rows [256,384): W2
W3_ROW = 3 * HID                  # rows [384,512): W3_eff (tx/ty folded, lanes 63..127 zero)
SLAB_ROWS = 4 * HID               # 512 rows -> 512*128*2B = 128 KB


# ----------------------------------------------------------------------------
# Pallas kernel: stitching MLP + keypoint update, emits one (1,1,8,128) tile
# ----------------------------------------------------------------------------
def _stitching_kernel(x_ref, w_ref, b_ref, o_ref):
    blk = x_ref[0, 0]                                # (8,128) f32 window of x[0,0,:8,:128]
    row_src = blk[0:1, :]                            # kp_source  (lanes 0..62 valid)
    row_drv = blk[1:2, :]                            # kp_driving (kept in f32 for passthrough)

    # Fused layer 1 (126 -> 128) as one K=256 matmul. Garbage input lanes
    # 63..127 / 191..255 hit zero weight rows, so no input masking is needed.
    feat = jnp.concatenate([row_src, row_drv], axis=1).astype(jnp.bfloat16)   # (1,256)
    h1 = jnp.dot(feat, w_ref[W1_ROW:W1_ROW + 2 * HID, :],
                 preferred_element_type=jnp.float32)
    h1 = jnp.maximum(h1 + b_ref[0:1, :], 0.0)

    # Layer 2 (128 -> 128)
    h2 = jnp.dot(h1.astype(jnp.bfloat16), w_ref[W2_ROW:W2_ROW + HID, :],
                 preferred_element_type=jnp.float32)
    h2 = jnp.maximum(h2 + b_ref[1:2, :], 0.0)

    # Layer 3 (128 -> 63) with tx/ty already folded into W3_eff / b3_eff.
    delta = jnp.dot(h2.astype(jnp.bfloat16), w_ref[W3_ROW:W3_ROW + HID, :],
                    preferred_element_type=jnp.float32) + b_ref[2:3, :]

    row_new = row_drv + delta                        # (1,128) f32

    # Build the full 8x128 tile once and do a single unmasked store.
    sub = lax.broadcasted_iota(jnp.int32, (8, HID), 0)
    lane = lax.broadcasted_iota(jnp.int32, (8, HID), 1)
    tile = jnp.where((sub == 0) & (lane < FEAT_HALF),
                     jnp.broadcast_to(row_new, (8, HID)), 0.0)
    o_ref[...] = tile.reshape(1, 1, 8, HID)


def _run_stitching_kernel(x, slab, biases):
    cost = pl.CostEstimate(
        flops=2 * (2 * HID * HID + HID * HID + HID * HID),
        transcendentals=0,
        bytes_accessed=(8 * HID * 4            # x window
                        + SLAB_ROWS * HID * 2  # bf16 weight slab
                        + 8 * HID * 4          # f32 biases
                        + 8 * HID * 4))        # output tile
    return pl.pallas_call(
        _stitching_kernel,
        out_shape=jax.ShapeDtypeStruct((1, 1, 8, HID), jnp.float32),
        grid=(1,),
        in_specs=[
            # Only the (1,1,8,128) window of x is DMA'd; constant index maps
            # keep x window / slab / biases resident.
            pl.BlockSpec((1, 1, 8, HID), lambda i: (0, 0, 0, 0)),
            pl.BlockSpec((SLAB_ROWS, HID), lambda i: (0, 0)),
            pl.BlockSpec((8, HID), lambda i: (0, 0)),
        ],
        out_specs=pl.BlockSpec((1, 1, 8, HID), lambda i: (0, 0, 0, 0)),
        compiler_params=pltpu.CompilerParams(
            dimension_semantics=("arbitrary",)),
        cost_estimate=cost,
    )(x, slab, biases)


# ----------------------------------------------------------------------------
# Parameters (synthetic, deterministic) and host-side packing
# ----------------------------------------------------------------------------
def init_params(key):
    """Stitching MLP: 126 -> 128 -> 128 -> 65 (LivePortrait stitching net)."""
    ks = jax.random.split(key, 6)
    W1 = 0.05 * jax.random.normal(ks[0], (2 * FEAT_HALF, HID), jnp.float32)
    b1 = 0.05 * jax.random.normal(ks[1], (HID,), jnp.float32)
    W2 = 0.05 * jax.random.normal(ks[2], (HID, HID), jnp.float32)
    b2 = 0.05 * jax.random.normal(ks[3], (HID,), jnp.float32)
    W3 = 0.05 * jax.random.normal(ks[4], (HID, OUT), jnp.float32)
    b3 = 0.05 * jax.random.normal(ks[5], (OUT,), jnp.float32)
    return W1, b1, W2, b2, W3, b3


def pack_params(params):
    """Fold tx/ty into W3/b3 and pack weights (bf16 slab) + biases (f32)."""
    W1, b1, W2, b2, W3, b3 = params

    # kp_new[j] = kp_driving[j] + delta[j] + tx*(j%3==0) + ty*(j%3==1)
    # with tx = delta[63], ty = delta[64] -> fold linearly into W3 / b3.
    idx = jnp.arange(FEAT_HALF)
    m0 = (idx % 3 == 0).astype(jnp.float32)
    m1 = (idx % 3 == 1).astype(jnp.float32)
    W3_eff = (W3[:, :FEAT_HALF]
              + jnp.outer(W3[:, FEAT_HALF], m0)
              + jnp.outer(W3[:, FEAT_HALF + 1], m1))          # (128, 63)
    b3_eff = b3[:FEAT_HALF] + b3[FEAT_HALF] * m0 + b3[FEAT_HALF + 1] * m1

    slab = jnp.zeros((SLAB_ROWS, HID), jnp.float32)
    slab = slab.at[W1_ROW:W1_ROW + FEAT_HALF, :].set(W1[:FEAT_HALF])
    slab = slab.at[W1_ROW + HID:W1_ROW + HID + FEAT_HALF, :].set(W1[FEAT_HALF:])
    slab = slab.at[W2_ROW:W2_ROW + HID, :].set(W2)
    slab = slab.at[W3_ROW:W3_ROW + HID, :FEAT_HALF].set(W3_eff)

    biases = jnp.zeros((8, HID), jnp.float32)
    biases = biases.at[0, :].set(b1)
    biases = biases.at[1, :].set(b2)
    biases = biases.at[2, :FEAT_HALF].set(b3_eff)
    return slab.astype(jnp.bfloat16), biases


def live_portrait_stitching_forward(x, slab, biases):
    """x: (1, c, h, w) f32 NCHW with h >= 8, w >= 128.
    Returns (1, 1, h, w) f32: zero canvas with updated driving kps in row 0.
    The zero canvas + scatter is left to XLA (fused memset + update slice),
    which is at/above the Pallas grid-walk roofline on every TPU generation."""
    b, c, h, w = x.shape
    assert b == 1, "stitching module reshapes to batch 1"
    assert h >= 8 and w >= HID, "kernel window needs h >= 8 and w >= 128"
    tile = _run_stitching_kernel(x.astype(jnp.float32), slab, biases)
    out = jnp.zeros((b, 1, h, w), jnp.float32)
    return lax.dynamic_update_slice(out, tile, (0, 0, 0, 0))


# ----------------------------------------------------------------------------
# Pure-JAX reference (mirrors the PyTorch forward exactly, f32 weights)
# ----------------------------------------------------------------------------
def reference_forward(x, params):
    W1, b1, W2, b2, W3, b3 = params
    b, c, h, w = x.shape
    kp_source = x[:, 0, 0, :FEAT_HALF].reshape(1, NUM_KP, 3)
    kp_driving = x[:, 0, 1, :FEAT_HALF].reshape(1, NUM_KP, 3)
    feat = jnp.concatenate(
        [kp_source.reshape(1, -1), kp_driving.reshape(1, -1)], axis=1)
    hdn = jax.nn.relu(feat @ W1 + b1)
    hdn = jax.nn.relu(hdn @ W2 + b2)
    delta = hdn @ W3 + b3
    delta_exp = delta[..., :3 * NUM_KP].reshape(1, NUM_KP, 3)
    delta_tx_ty = delta[..., 3 * NUM_KP:3 * NUM_KP + 2].reshape(1, 1, 2)
    kp_new = kp_driving + delta_exp
    kp_new = kp_new.at[..., :2].add(delta_tx_ty)
    out = jnp.zeros((b, 1, h, w), jnp.float32)
    out = out.at[0, 0, 0, :FEAT_HALF].set(kp_new.reshape(-1))
    return out


if __name__ == "__main__":
    key = jax.random.PRNGKey(0)
    k_x, k_p = jax.random.split(key)

    # b=1 (required by the reshape in the PyTorch forward), c=3 channels,
    # h=16, w=256 (>= 63 keypoint lanes) -> exercises the zero-canvas path.
    x = jax.random.normal(k_x, (1, 3, 16, 256), jnp.float32)
    params = init_params(k_p)
    slab, biases = pack_params(params)         # bf16 weight slab + f32 biases

    fwd = jax.jit(live_portrait_stitching_forward)
    out = jax.block_until_ready(fwd(x, slab, biases))

    ref = reference_forward(x, params)
    # bf16 weights/activations inside the kernel vs f32 reference; biases and
    # the kp_driving passthrough stay f32, so only the small MLP delta carries
    # bf16 error (few e-3 abs).
    np.testing.assert_allclose(np.asarray(out), np.asarray(ref),
                               rtol=1e-2, atol=2e-2)
    print("KERNEL_OK")
</pallas_src>

<mosaic_0001>
module attributes {stable_mosaic.version = 11 : i64} {
  func.func @_stitching_kernel(%arg0: i32, %arg1: memref<1x1x8x128xf32, #tpu.memory_space<vmem>>, %arg2: memref<512x128xbf16, #tpu.memory_space<vmem>>, %arg3: memref<8x128xf32, #tpu.memory_space<vmem>>, %arg4: memref<1x1x8x128xf32, #tpu.memory_space<vmem>>) attributes {dimension_semantics = [#tpu.dimension_semantics<arbitrary>], iteration_bounds = array<i64: 1>, scalar_prefetch = 0 : i64, scratch_operands = 0 : i64, tpu.core_type = #tpu.core_type<tc>, window_params = [{transform_indices = @transform_0, window_bounds = array<i64: 1, 1, 8, 128>}, {pipeline_mode = #tpu.pipeline_mode<synchronous>, transform_indices = @transform_1, window_bounds = array<i64: 512, 128>}, {pipeline_mode = #tpu.pipeline_mode<synchronous>, transform_indices = @transform_2, window_bounds = array<i64: 8, 128>}, {pipeline_mode = #tpu.pipeline_mode<synchronous>, transform_indices = @transform_3, window_bounds = array<i64: 1, 1, 8, 128>}]} {
    %c0 = arith.constant 0 : index
    %c0_0 = arith.constant 0 : index
    %c0_1 = arith.constant 0 : index
    %c0_2 = arith.constant 0 : index
    %0 = vector.load %arg1[%c0, %c0_0, %c0_1, %c0_2] : memref<1x1x8x128xf32, #tpu.memory_space<vmem>>, vector<1x1x8x128xf32>
    %1 = vector.shape_cast %0 : vector<1x1x8x128xf32> to vector<8x128xf32>
    %2 = vector.extract_strided_slice %1 {offsets = [0, 0], sizes = [1, 128], strides = [1, 1]} : vector<8x128xf32> to vector<1x128xf32>
    %3 = vector.extract_strided_slice %1 {offsets = [1, 0], sizes = [1, 128], strides = [1, 1]} : vector<8x128xf32> to vector<1x128xf32>
    %4 = tpu.concatenate %2, %3 in 1 : vector<1x128xf32>, vector<1x128xf32> -> vector<1x256xf32>
    %5 = arith.truncf %4 : vector<1x256xf32> to vector<1x256xbf16>
    %c0_3 = arith.constant 0 : index
    %c0_4 = arith.constant 0 : index
    %6 = vector.load %arg2[%c0_3, %c0_4] : memref<512x128xbf16, #tpu.memory_space<vmem>>, vector<256x128xbf16>
    %cst = arith.constant dense<0.000000e+00> : vector<1x128xf32>
    %7 = tpu.matmul %5, %6, %cst {dimension_numbers = #tpu.dot_dimension_numbers<[1], [0], [0], [1], [0, 0, 1, 1], [], []>} : vector<1x256xbf16>, vector<256x128xbf16>, vector<1x128xf32> -> vector<1x128xf32>
    %c0_5 = arith.constant 0 : index
    %c0_6 = arith.constant 0 : index
    %8 = vector.load %arg3[%c0_5, %c0_6] : memref<8x128xf32, #tpu.memory_space<vmem>>, vector<1x128xf32>
    %9 = arith.addf %7, %8 : vector<1x128xf32>
    %cst_7 = arith.constant 0.000000e+00 : f32
    %10 = vector.broadcast %cst_7 : f32 to vector<1x128xf32>
    %11 = arith.maximumf %9, %10 : vector<1x128xf32>
    %12 = arith.truncf %11 : vector<1x128xf32> to vector<1x128xbf16>
    %c256 = arith.constant 256 : index
    %c0_8 = arith.constant 0 : index
    %13 = vector.load %arg2[%c256, %c0_8] : memref<512x128xbf16, #tpu.memory_space<vmem>>, vector<128x128xbf16>
    %cst_9 = arith.constant dense<0.000000e+00> : vector<1x128xf32>
    %14 = tpu.matmul %12, %13, %cst_9 {dimension_numbers = #tpu.dot_dimension_numbers<[1], [0], [0], [1], [0, 0, 1, 1], [], []>} : vector<1x128xbf16>, vector<128x128xbf16>, vector<1x128xf32> -> vector<1x128xf32>
    %c1 = arith.constant 1 : index
    %c0_10 = arith.constant 0 : index
    %15 = vector.load %arg3[%c1, %c0_10] : memref<8x128xf32, #tpu.memory_space<vmem>>, vector<1x128xf32>
    %16 = arith.addf %14, %15 : vector<1x128xf32>
    %cst_11 = arith.constant 0.000000e+00 : f32
    %17 = vector.broadcast %cst_11 : f32 to vector<1x128xf32>
    %18 = arith.maximumf %16, %17 : vector<1x128xf32>
    %19 = arith.truncf %18 : vector<1x128xf32> to vector<1x128xbf16>
    %c384 = arith.constant 384 : index
    %c0_12 = arith.constant 0 : index
    %20 = vector.load %arg2[%c384, %c0_12] : memref<512x128xbf16, #tpu.memory_space<vmem>>, vector<128x128xbf16>
    %cst_13 = arith.constant dense<0.000000e+00> : vector<1x128xf32>
    %21 = tpu.matmul %19, %20, %cst_13 {dimension_numbers = #tpu.dot_dimension_numbers<[1], [0], [0], [1], [0, 0, 1, 1], [], []>} : vector<1x128xbf16>, vector<128x128xbf16>, vector<1x128xf32> -> vector<1x128xf32>
    %c2 = arith.constant 2 : index
    %c0_14 = arith.constant 0 : index
    %22 = vector.load %arg3[%c2, %c0_14] : memref<8x128xf32, #tpu.memory_space<vmem>>, vector<1x128xf32>
    %23 = arith.addf %21, %22 : vector<1x128xf32>
    %24 = arith.addf %3, %23 : vector<1x128xf32>
    %25 = tpu.iota {dimensions = array<i32: 0>} : vector<8x128xi32>
    %26 = tpu.iota {dimensions = array<i32: 1>} : vector<8x128xi32>
    %c0_i32 = arith.constant 0 : i32
    %27 = vector.broadcast %c0_i32 : i32 to vector<8x128xi32>
    %28 = arith.cmpi eq, %25, %27 : vector<8x128xi32>
    %c63_i32 = arith.constant 63 : i32
    %29 = vector.broadcast %c63_i32 : i32 to vector<8x128xi32>
    %30 = arith.cmpi slt, %26, %29 : vector<8x128xi32>
    %31 = arith.andi %28, %30 : vector<8x128xi1>
    %32 = vector.shape_cast %24 : vector<1x128xf32> to vector<1x128xf32>
    %33 = vector.broadcast %32 : vector<1x128xf32> to vector<8x128xf32>
    %cst_15 = arith.constant 0.000000e+00 : f32
    %34 = vector.broadcast %cst_15 : f32 to vector<8x128xf32>
    %35 = arith.select %31, %33, %34 : vector<8x128xi1>, vector<8x128xf32>
    %36 = vector.shape_cast %35 : vector<8x128xf32> to vector<1x1x8x128xf32>
    %c0_16 = arith.constant 0 : index
    %c0_17 = arith.constant 0 : index
    %c0_18 = arith.constant 0 : index
    %c0_19 = arith.constant 0 : index
    %37 = vector.load %arg4[%c0_16, %c0_17, %c0_18, %c0_19] : memref<1x1x8x128xf32, #tpu.memory_space<vmem>>, vector<1x1x8x128xf32>
    tpu.vector_store %arg4[%c0_16, %c0_17, %c0_18, %c0_19], %36 {strides = array<i32>} : memref<1x1x8x128xf32, #tpu.memory_space<vmem>>, vector<1x1x8x128xf32>,
    return
  }
  func.func @transform_0(%arg0: i32) -> (i32, i32, i32, i32) {
    %c0_i32 = arith.constant 0 : i32
    %c0_i32_0 = arith.constant 0 : i32
    %c0_i32_1 = arith.constant 0 : i32
    %c0_i32_2 = arith.constant 0 : i32
    %c0_i32_3 = arith.constant 0 : i32
    return %c0_i32, %c0_i32_0, %c0_i32_1, %c0_i32_2 : i32, i32, i32, i32
  }
  func.func @transform_1(%arg0: i32) -> (i32, i32) {
    %c0_i32 = arith.constant 0 : i32
    %c0_i32_0 = arith.constant 0 : i32
    %c0_i32_1 = arith.constant 0 : i32
    return %c0_i32, %c0_i32_0 : i32, i32
  }
  func.func @transform_2(%arg0: i32) -> (i32, i32) {
    %c0_i32 = arith.constant 0 : i32
    %c0_i32_0 = arith.constant 0 : i32
    %c0_i32_1 = arith.constant 0 : i32
    return %c0_i32, %c0_i32_0 : i32, i32
  }
  func.func @transform_3(%arg0: i32) -> (i32, i32, i32, i32) {
    %c0_i32 = arith.constant 0 : i32
    %c0_i32_0 = arith.constant 0 : i32
    %c0_i32_1 = arith.constant 0 : i32
    %c0_i32_2 = arith.constant 0 : i32
    %c0_i32_3 = arith.constant 0 : i32
    return %c0_i32, %c0_i32_0, %c0_i32_1, %c0_i32_2 : i32, i32, i32, i32
  }
}

</mosaic_0001>

<llo_original>
// kernel: live_portrait_stitching_forward.1
$region0: #{live_portrait_stitching_forward.1}
  #allocation0 [shape = 'u32[]', space=smem, size = 0x4, offset = 0x4, fixed_abs, tag = 'smem constant byte address 0x4 - core index']
  #allocation1 [shape = 'u32[144,128]{1,0:T(1,128)}', space=vmem, size = 0x12000, scoped, tag = 'internal scratch']
  %s0 = inlined_call_operand.hbm [shape: f32[1,3,16,256], index: 0, kind: input, shape index: {}]
  %s1 = inlined_call_operand.hbm [shape: bf16[512,128], index: 1, kind: input, shape index: {}]
  %s2 = inlined_call_operand.hbm [shape: f32[8,128], index: 2, kind: input, shape index: {}]
  %s3 = inlined_call_operand.vmem [shape: f32[1,1,8,128], index: 3, kind: output, shape index: {}]
  %s4 = sld [smem:[#allocation0]]
  $region34: #{live_portrait_stitching_forward.1} parent=0
    _
  %s6 = ssub.s32 1, %s4
  %s7 = scalar_select 0, %s6, %s4
  $region1: #{live_portrait_stitching_forward.1} parent=0
    #allocation2 [shape = 'u8[4096]{0}', space=vmem, size = 0x1000, scoped, tag = 'input window, operand 0, single buffered']
    #allocation3 [shape = 's32[1]{0}', space=sflag, size = 0x4, scoped, tag = 'scoped memory for live_portrait_stitching_forward.1']
    #allocation4 [shape = 'u8[131072]{0}', space=vmem, size = 0x20000, scoped, tag = 'input window, operand 1, single buffered']
    #allocation5 [shape = 's32[1]{0}', space=sflag, size = 0x4, scoped, tag = 'scoped memory for live_portrait_stitching_forward.1']
    #allocation6 [shape = 'u8[4096]{0}', space=vmem, size = 0x1000, scoped, tag = 'input window, operand 2, single buffered']
    %8 = vsyncpa [#allocation3], 0
    %9 = vsyncpa [#allocation5], 0
    // Predicated region
    $region2: #{live_portrait_stitching_forward.1} parent=1 // pred_check
      _
    $region3: #{live_portrait_stitching_forward.1} parent=1 // pred_check_branch
      %11 = sbr.rel (0) target = $region5
    $region4: #{live_portrait_stitching_forward.1} parent=1 // pred_region
      %s13 = ssub.s32 128, 128
      %14 = vsyncadd [#allocation3], %s13
      %s16 = sshll.u32 [#allocation2], 4
      %s17 = int_to_ptr.vmem [resolvable:$true] %s16
      %19 = dma.hbm_to_vmem [thread:$0]  %s0, 128, %s17, [#allocation3]
    $region5: #{live_portrait_stitching_forward.1} parent=1 // pred_fallthru
      _
    // Predicated region
    $region6: #{live_portrait_stitching_forward.1} parent=1 // pred_check
      _
    $region7: #{live_portrait_stitching_forward.1} parent=1 // pred_check_branch
      %21 = sbr.rel (0) target = $region9
    $region8: #{live_portrait_stitching_forward.1} parent=1 // pred_region
      %s23 = ssub.s32 4096, 4096
      %24 = vsyncadd [#allocation5], %s23
      %s25 = sshll.u32 [#allocation4], 4
      %s26 = int_to_ptr.vmem [resolvable:$true] %s25
      %31 = dma.hbm_to_vmem [thread:$0]  %s1, 4096, %s26, [#allocation5], 64, 64, 4
    $region9: #{live_portrait_stitching_forward.1} parent=1 // pred_fallthru
      _
    // Predicated region
    $region10: #{live_portrait_stitching_forward.1} parent=1 // pred_check
      _
    $region11: #{live_portrait_stitching_forward.1} parent=1 // pred_check_branch
      %33 = sbr.rel (0) target = $region13
    $region12: #{live_portrait_stitching_forward.1} parent=1 // pred_region
      %s35 = ssub.s32 128, 128
      %36 = vsyncadd [#allocation5], %s35
      %s38 = sshll.u32 [#allocation6], 4
      %s39 = int_to_ptr.vmem [resolvable:$true] %s38
      %41 = dma.hbm_to_vmem [thread:$0]  %s2, 128, %s39, [#allocation5]
    $region13: #{live_portrait_stitching_forward.1} parent=1 // pred_fallthru
      _
    // Predicated region
    $region14: #{live_portrait_stitching_forward.1} parent=1 // pred_check
      _
    $region15: #{live_portrait_stitching_forward.1} parent=1 // pred_check_branch
      %43 = sbr.rel (0) target = $region17
    $region16: #{live_portrait_stitching_forward.1} parent=1 // pred_region
      %44 = dma.done [#allocation3], 128
    $region17: #{live_portrait_stitching_forward.1} parent=1 // pred_fallthru
      _
    // Predicated region
    $region18: #{live_portrait_stitching_forward.1} parent=1 // pred_check
      _
    $region19: #{live_portrait_stitching_forward.1} parent=1 // pred_check_branch
      %46 = sbr.rel (0) target = $region21
    $region20: #{live_portrait_stitching_forward.1} parent=1 // pred_region
      %47 = dma.done [#allocation5], 4096
    $region21: #{live_portrait_stitching_forward.1} parent=1 // pred_fallthru
      _
    // Predicated region
    $region22: #{live_portrait_stitching_forward.1} parent=1 // pred_check
      _
    $region23: #{live_portrait_stitching_forward.1} parent=1 // pred_check_branch
      %49 = sbr.rel (0) target = $region25
    $region24: #{live_portrait_stitching_forward.1} parent=1 // pred_region
      %50 = dma.done [#allocation5], 128
    $region25: #{live_portrait_stitching_forward.1} parent=1 // pred_fallthru
      _
    %v52 = vld [vmem:[#allocation2] sm:$0xff]
    %v54 = vrot.slane %v52, 1
    %v56 = vpack.c.bf16 %v52, %v52
    %v57 = vpack.c.bf16 %v54, %v54
    %v58 = vld [vmem:[#allocation4] sm:$0xf]
    %v59 = vld [vmem:[#allocation4 + $0x4] sm:$0xf]
    %v60 = vld [vmem:[#allocation4 + $0x8] sm:$0xf]
    %v61 = vld [vmem:[#allocation4 + $0xc] sm:$0xf]
    %v62 = vld [vmem:[#allocation4 + $0x10] sm:$0xf]
    %v63 = vld [vmem:[#allocation4 + $0x14] sm:$0xf]
    %v64 = vld [vmem:[#allocation4 + $0x18] sm:$0xf]
    %v65 = vld [vmem:[#allocation4 + $0x1c] sm:$0xf]
    %v66 = vld [vmem:[#allocation4 + $0x20] sm:$0xf]
    %v67 = vld [vmem:[#allocation4 + $0x24] sm:$0xf]
    %v68 = vld [vmem:[#allocation4 + $0x28] sm:$0xf]
    %v69 = vld [vmem:[#allocation4 + $0x2c] sm:$0xf]
    %v70 = vld [vmem:[#allocation4 + $0x30] sm:$0xf]
    %v71 = vld [vmem:[#allocation4 + $0x34] sm:$0xf]
    %v72 = vld [vmem:[#allocation4 + $0x38] sm:$0xf]
    %v73 = vld [vmem:[#allocation4 + $0x3c] sm:$0xf]
    %v74 = vld [vmem:[#allocation4 + $0x40] sm:$0xf]
    %v75 = vld [vmem:[#allocation4 + $0x44] sm:$0xf]
    %v76 = vld [vmem:[#allocation4 + $0x48] sm:$0xf]
    %v77 = vld [vmem:[#allocation4 + $0x4c] sm:$0xf]
    %v78 = vld [vmem:[#allocation4 + $0x50] sm:$0xf]
    %v79 = vld [vmem:[#allocation4 + $0x54] sm:$0xf]
    %v80 = vld [vmem:[#allocation4 + $0x58] sm:$0xf]
    %v81 = vld [vmem:[#allocation4 + $0x5c] sm:$0xf]
    %v82 = vld [vmem:[#allocation4 + $0x60] sm:$0xf]
    %v83 = vld [vmem:[#allocation4 + $0x64] sm:$0xf]
    %v84 = vld [vmem:[#allocation4 + $0x68] sm:$0xf]
    %v85 = vld [vmem:[#allocation4 + $0x6c] sm:$0xf]
    %v86 = vld [vmem:[#allocation4 + $0x70] sm:$0xf]
    %v87 = vld [vmem:[#allocation4 + $0x74] sm:$0xf]
    %v88 = vld [vmem:[#allocation4 + $0x78] sm:$0xf]
    %v89 = vld [vmem:[#allocation4 + $0x7c] sm:$0xf]
    %v90 = vld [vmem:[#allocation6] sm:$0x1]
    %v123 = vunpack.c.l.b16 %v58
    %v124 = vunpack.c.l.b16 %v59
    %v125 = vunpack.c.l.b16 %v60
    %v126 = vunpack.c.l.b16 %v61
    %v127 = vunpack.c.l.b16 %v62
    %v128 = vunpack.c.l.b16 %v63
    %v129 = vunpack.c.l.b16 %v64
    %v130 = vunpack.c.l.b16 %v65
    %v131 = vunpack.c.l.b16 %v66
    %v132 = vunpack.c.l.b16 %v67
    %v133 = vunpack.c.l.b16 %v68
    %v134 = vunpack.c.l.b16 %v69
    %v135 = vunpack.c.l.b16 %v70
    %v136 = vunpack.c.l.b16 %v71
    %v137 = vunpack.c.l.b16 %v72
    %v138 = vunpack.c.l.b16 %v73
    %v139 = vunpack.c.l.b16 %v74
    %v140 = vunpack.c.l.b16 %v75
    %v141 = vunpack.c.l.b16 %v76
    %v142 = vunpack.c.l.b16 %v77
    %v143 = vunpack.c.l.b16 %v78
    %v144 = vunpack.c.l.b16 %v79
    %v145 = vunpack.c.l.b16 %v80
    %v146 = vunpack.c.l.b16 %v81
    %v147 = vunpack.c.l.b16 %v82
    %v148 = vunpack.c.l.b16 %v83
    %v149 = vunpack.c.l.b16 %v84
    %v150 = vunpack.c.l.b16 %v85
    %v151 = vunpack.c.l.b16 %v86
    %v152 = vunpack.c.l.b16 %v87
    %v153 = vunpack.c.l.b16 %v88
    %v154 = vunpack.c.l.b16 %v89
    %v155 = vpack.c.b16 %v124, %v123
    %v156 = vpack.c.b16 %v126, %v125
    %v157 = vpack.c.b16 %v128, %v127
    %v158 = vpack.c.b16 %v130, %v129
    %v159 = vpack.c.b16 %v132, %v131
    %v160 = vpack.c.b16 %v134, %v133
    %v161 = vpack.c.b16 %v136, %v135
    %v162 = vpack.c.b16 %v138, %v137
    %v163 = vpack.c.b16 %v140, %v139
    %v164 = vpack.c.b16 %v142, %v141
    %v165 = vpack.c.b16 %v144, %v143
    %v166 = vpack.c.b16 %v146, %v145
    %v167 = vpack.c.b16 %v148, %v147
    %v168 = vpack.c.b16 %v150, %v149
    %v169 = vpack.c.b16 %v152, %v151
    %v170 = vpack.c.b16 %v154, %v153
    %187 = vmatprep.subr.bf16.mxu0 0
    %188 = vmatpush1.bf16.msra.mxu0 %v155
    %189 = vmatprep.subr.bf16.mxu0 0
    %190 = vmatpush1.bf16.msra.mxu0 %v156
    %191 = vmatprep.subr.bf16.mxu0 0
    %192 = vmatpush1.bf16.msra.mxu0 %v157
    %193 = vmatprep.subr.bf16.mxu0 0
    %194 = vmatpush1.bf16.msra.mxu0 %v158
    %195 = vmatprep.subr.bf16.mxu0 0
    %196 = vmatpush1.bf16.msra.mxu0 %v159
    %197 = vmatprep.subr.bf16.mxu0 0
    %198 = vmatpush1.bf16.msra.mxu0 %v160
    %199 = vmatprep.subr.bf16.mxu0 0
    %200 = vmatpush1.bf16.msra.mxu0 %v161
    %201 = vmatprep.subr.bf16.mxu0 0
    %202 = vmatpush1.bf16.msra.mxu0 %v162
    %203 = vmatprep.subr.bf16.mxu0 0
    %204 = vmatpush1.bf16.msra.mxu0 %v163
    %205 = vmatprep.subr.bf16.mxu0 0
    %206 = vmatpush1.bf16.msra.mxu0 %v164
    %207 = vmatprep.subr.bf16.mxu0 0
    %208 = vmatpush1.bf16.msra.mxu0 %v165
    %209 = vmatprep.subr.bf16.mxu0 0
    %210 = vmatpush1.bf16.msra.mxu0 %v166
    %211 = vmatprep.subr.bf16.mxu0 0
    %212 = vmatpush1.bf16.msra.mxu0 %v167
    %213 = vmatprep.subr.bf16.mxu0 0
    %214 = vmatpush1.bf16.msra.mxu0 %v168
    %215 = vmatprep.subr.bf16.mxu0 0
    %216 = vmatpush1.bf16.msra.mxu0 %v169
    %217 = vmatprep.subr.bf16.mxu0 0
    %218 = vmatpush1.bf16.msra.mxu0 %v170
    %219 = vmatprep.mubr.bf16.mxu0 %v57
    %220 = vmatmul.mubr.bf16.gmra.mrb[0].mxu0 %v56
    %v221 = vpop.f32.mrb[0].mxu0
    %v222 = vadd.f32 %v90, %v221
    %v223 = vpop.f32.mrb[0].mxu0
    %v224 = vpop.f32.mrb[0].mxu0
    %v225 = vpop.f32.mrb[0].mxu0
    %226 = vdwg.mxu0
    %v227 = vmax.f32 %v222, 0.0
    %v228 = vpack.c.bf16 %v227, %v227
    %v229 = vld [vmem:[#allocation4 + $0x80] sm:$0xf]
    %v230 = vld [vmem:[#allocation4 + $0x84] sm:$0xf]
    %v231 = vld [vmem:[#allocation4 + $0x88] sm:$0xf]
    %v232 = vld [vmem:[#allocation4 + $0x8c] sm:$0xf]
    %v233 = vld [vmem:[#allocation4 + $0x90] sm:$0xf]
    %v234 = vld [vmem:[#allocation4 + $0x94] sm:$0xf]
    %v235 = vld [vmem:[#allocation4 + $0x98] sm:$0xf]
    %v236 = vld [vmem:[#allocation4 + $0x9c] sm:$0xf]
    %v237 = vld [vmem:[#allocation4 + $0xa0] sm:$0xf]
    %v238 = vld [vmem:[#allocation4 + $0xa4] sm:$0xf]
    %v239 = vld [vmem:[#allocation4 + $0xa8] sm:$0xf]
    %v240 = vld [vmem:[#allocation4 + $0xac] sm:$0xf]
    %v241 = vld [vmem:[#allocation4 + $0xb0] sm:$0xf]
    %v242 = vld [vmem:[#allocation4 + $0xb4] sm:$0xf]
    %v243 = vld [vmem:[#allocation4 + $0xb8] sm:$0xf]
    %v244 = vld [vmem:[#allocation4 + $0xbc] sm:$0xf]
    %v245 = vld [vmem:[#allocation6 + $0x1] sm:$0x1]
    %v262 = vunpack.c.l.b16 %v229
    %v263 = vunpack.c.l.b16 %v230
    %v264 = vunpack.c.l.b16 %v231
    %v265 = vunpack.c.l.b16 %v232
    %v266 = vunpack.c.l.b16 %v233
    %v267 = vunpack.c.l.b16 %v234
    %v268 = vunpack.c.l.b16 %v235
    %v269 = vunpack.c.l.b16 %v236
    %v270 = vunpack.c.l.b16 %v237
    %v271 = vunpack.c.l.b16 %v238
    %v272 = vunpack.c.l.b16 %v239
    %v273 = vunpack.c.l.b16 %v240
    %v274 = vunpack.c.l.b16 %v241
    %v275 = vunpack.c.l.b16 %v242
    %v276 = vunpack.c.l.b16 %v243
    %v277 = vunpack.c.l.b16 %v244
    %v278 = vpack.c.b16 %v263, %v262
    %v279 = vpack.c.b16 %v265, %v264
    %v280 = vpack.c.b16 %v267, %v266
    %v281 = vpack.c.b16 %v269, %v268
    %v282 = vpack.c.b16 %v271, %v270
    %v283 = vpack.c.b16 %v273, %v272
    %v284 = vpack.c.b16 %v275, %v274
    %v285 = vpack.c.b16 %v277, %v276
    %294 = vmatprep.subr.bf16.mxu0 0
    %295 = vmatpush1.bf16.msra.mxu0 %v278
    %296 = vmatprep.subr.bf16.mxu0 0
    %297 = vmatpush1.bf16.msra.mxu0 %v279
    %298 = vmatprep.subr.bf16.mxu0 0
    %299 = vmatpush1.bf16.msra.mxu0 %v280
    %300 = vmatprep.subr.bf16.mxu0 0
    %301 = vmatpush1.bf16.msra.mxu0 %v281
    %302 = vmatprep.subr.bf16.mxu0 0
    %303 = vmatpush1.bf16.msra.mxu0 %v282
    %304 = vmatprep.subr.bf16.mxu0 0
    %305 = vmatpush1.bf16.msra.mxu0 %v283
    %306 = vmatprep.subr.bf16.mxu0 0
    %307 = vmatpush1.bf16.msra.mxu0 %v284
    %308 = vmatprep.subr.bf16.mxu0 0
    %309 = vmatpush1.bf16.msra.mxu0 %v285
    %310 = vmatprep.subr.bf16.mxu0 0
    %311 = vmatpush1.bf16.msra.mxu0 0
    %312 = vmatprep.subr.bf16.mxu0 0
    %313 = vmatpush1.bf16.msra.mxu0 0
    %314 = vmatprep.subr.bf16.mxu0 0
    %315 = vmatpush1.bf16.msra.mxu0 0
    %316 = vmatprep.subr.bf16.mxu0 0
    %317 = vmatpush1.bf16.msra.mxu0 0
    %318 = vmatprep.subr.bf16.mxu0 0
    %319 = vmatpush1.bf16.msra.mxu0 0
    %320 = vmatprep.subr.bf16.mxu0 0
    %321 = vmatpush1.bf16.msra.mxu0 0
    %322 = vmatprep.subr.bf16.mxu0 0
    %323 = vmatpush1.bf16.msra.mxu0 0
    %324 = vmatprep.subr.bf16.mxu0 0
    %325 = vmatpush1.bf16.msra.mxu0 0
    %326 = vmatprep.mubr.bf16.mxu0 0
    %327 = vmatmul.mubr.bf16.gmra.mrb[0].mxu0 %v228
    %v328 = vpop.f32.mrb[0].mxu0
    %v329 = vadd.f32 %v245, %v328
    %v330 = vpop.f32.mrb[0].mxu0
    %v331 = vpop.f32.mrb[0].mxu0
    %v332 = vpop.f32.mrb[0].mxu0
    %333 = vdwg.mxu0
    %v334 = vmax.f32 %v329, 0.0
    %v335 = vpack.c.bf16 %v334, %v334
    %v336 = vld [vmem:[#allocation4 + $0xc0] sm:$0xf]
    %v337 = vld [vmem:[#allocation4 + $0xc4] sm:$0xf]
    %v338 = vld [vmem:[#allocation4 + $0xc8] sm:$0xf]
    %v339 = vld [vmem:[#allocation4 + $0xcc] sm:$0xf]
    %v340 = vld [vmem:[#allocation4 + $0xd0] sm:$0xf]
    %v341 = vld [vmem:[#allocation4 + $0xd4] sm:$0xf]
    %v342 = vld [vmem:[#allocation4 + $0xd8] sm:$0xf]
    %v343 = vld [vmem:[#allocation4 + $0xdc] sm:$0xf]
    %v344 = vld [vmem:[#allocation4 + $0xe0] sm:$0xf]
    %v345 = vld [vmem:[#allocation4 + $0xe4] sm:$0xf]
    %v346 = vld [vmem:[#allocation4 + $0xe8] sm:$0xf]
    %v347 = vld [vmem:[#allocation4 + $0xec] sm:$0xf]
    %v348 = vld [vmem:[#allocation4 + $0xf0] sm:$0xf]
    %v349 = vld [vmem:[#allocation4 + $0xf4] sm:$0xf]
    %v350 = vld [vmem:[#allocation4 + $0xf8] sm:$0xf]
    %v351 = vld [vmem:[#allocation4 + $0xfc] sm:$0xf]
    %v352 = vld [vmem:[#allocation6 + $0x2] sm:$0x1]
    %v369 = vunpack.c.l.b16 %v336
    %v370 = vunpack.c.l.b16 %v337
    %v371 = vunpack.c.l.b16 %v338
    %v372 = vunpack.c.l.b16 %v339
    %v373 = vunpack.c.l.b16 %v340
    %v374 = vunpack.c.l.b16 %v341
    %v375 = vunpack.c.l.b16 %v342
    %v376 = vunpack.c.l.b16 %v343
    %v377 = vunpack.c.l.b16 %v344
    %v378 = vunpack.c.l.b16 %v345
    %v379 = vunpack.c.l.b16 %v346
    %v380 = vunpack.c.l.b16 %v347
    %v381 = vunpack.c.l.b16 %v348
    %v382 = vunpack.c.l.b16 %v349
    %v383 = vunpack.c.l.b16 %v350
    %v384 = vunpack.c.l.b16 %v351
    %v385 = vpack.c.b16 %v370, %v369
    %v386 = vpack.c.b16 %v372, %v371
    %v387 = vpack.c.b16 %v374, %v373
    %v388 = vpack.c.b16 %v376, %v375
    %v389 = vpack.c.b16 %v378, %v377
    %v390 = vpack.c.b16 %v380, %v379
    %v391 = vpack.c.b16 %v382, %v381
    %v392 = vpack.c.b16 %v384, %v383
    %401 = vmatprep.subr.bf16.mxu0 0
    %402 = vmatpush1.bf16.msra.mxu0 %v385
    %403 = vmatprep.subr.bf16.mxu0 0
    %404 = vmatpush1.bf16.msra.mxu0 %v386
    %405 = vmatprep.subr.bf16.mxu0 0
    %406 = vmatpush1.bf16.msra.mxu0 %v387
    %407 = vmatprep.subr.bf16.mxu0 0
    %408 = vmatpush1.bf16.msra.mxu0 %v388
    %409 = vmatprep.subr.bf16.mxu0 0
    %410 = vmatpush1.bf16.msra.mxu0 %v389
    %411 = vmatprep.subr.bf16.mxu0 0
    %412 = vmatpush1.bf16.msra.mxu0 %v390
    %413 = vmatprep.subr.bf16.mxu0 0
    %414 = vmatpush1.bf16.msra.mxu0 %v391
    %415 = vmatprep.subr.bf16.mxu0 0
    %416 = vmatpush1.bf16.msra.mxu0 %v392
    %417 = vmatprep.subr.bf16.mxu0 0
    %418 = vmatpush1.bf16.msra.mxu0 0
    %419 = vmatprep.subr.bf16.mxu0 0
    %420 = vmatpush1.bf16.msra.mxu0 0
    %421 = vmatprep.subr.bf16.mxu0 0
    %422 = vmatpush1.bf16.msra.mxu0 0
    %423 = vmatprep.subr.bf16.mxu0 0
    %424 = vmatpush1.bf16.msra.mxu0 0
    %425 = vmatprep.subr.bf16.mxu0 0
    %426 = vmatpush1.bf16.msra.mxu0 0
    %427 = vmatprep.subr.bf16.mxu0 0
    %428 = vmatpush1.bf16.msra.mxu0 0
    %429 = vmatprep.subr.bf16.mxu0 0
    %430 = vmatpush1.bf16.msra.mxu0 0
    %431 = vmatprep.subr.bf16.mxu0 0
    %432 = vmatpush1.bf16.msra.mxu0 0
    %433 = vmatprep.mubr.bf16.mxu0 0
    %434 = vmatmul.mubr.bf16.gmra.mrb[0].mxu0 %v335
    %v435 = vpop.f32.mrb[0].mxu0
    %v436 = vadd.f32 %v352, %v435
    %v437 = vpop.f32.mrb[0].mxu0
    %v438 = vpop.f32.mrb[0].mxu0
    %v439 = vpop.f32.mrb[0].mxu0
    %440 = vdwg.mxu0
    %v442 = vrot.slane %v436, 7
    %v444 = vadd.f32 %v52, %v442
    %v445 = vlaneseq
    %v446 = vshrl.u32 %v445, 7
    %v447 = vlaneseq
    %v448 = vand.u32 %v447, 127
    %vm449 = vcmp.eq.s32.totalorder %v446, 0
    %vm450 = vcmp.lt.s32.totalorder %v448, 63
    %vm451 = vmand %vm449, %vm450
    %v452 = vlaneseq
    %v453 = vshrl.u32 %v452, 7
    %v454 = vsub.s32 1, %v453
    %v455 = vrot.slane %v444, %v454
    %v456 = vsel %vm451, %v455, 0.0
    %457 = vst [vmem:[%s3] sm:$0xff] %v456
    // Predicated region
    $region26: #{live_portrait_stitching_forward.1} parent=1 // pred_check
      _
    $region27: #{live_portrait_stitching_forward.1} parent=1 // pred_check_branch
      %459 = sbr.rel (0) target = $region29
    $region28: #{live_portrait_stitching_forward.1} parent=1 // pred_region
      _
    $region29: #{live_portrait_stitching_forward.1} parent=1 // pred_fallthru
      _
    // Predicated region
    $region30: #{live_portrait_stitching_forward.1} parent=1 // pred_check
      _
    $region31: #{live_portrait_stitching_forward.1} parent=1 // pred_check_branch
      %461 = sbr.rel (0) target = $region33
    $region32: #{live_portrait_stitching_forward.1} parent=1 // pred_region
      _
    $region33: #{live_portrait_stitching_forward.1} parent=1 // pred_fallthru
      _
    %462 = vsyncpa [#allocation3], 1
    %463 = vsyncpa [#allocation5], 1

</llo_original>
